<compile_context>
chip_gen: v6e
topology: v6e:2x2x1
jax: 0.10.0
libtpu: 0.0.40
codegen_flags: <defaults>
</compile_context>

<pallas_src>
import jax
import jax.numpy as jnp
from jax.experimental import pallas as pl
from jax.experimental.pallas import tpu as pltpu

RMS_EPS = 1e-6


def _round_up(x, m):
    return ((x + m - 1) // m) * m


def _default_tiling():
    """Per-generation (tn, scoped-VMEM) defaults."""
    vmem_cap = 64 * 1024 * 1024          # conservative fallback (v7x per-TC VMEM)
    try:
        vmem_cap = int(pltpu.get_tpu_info().vmem_capacity_bytes)
    except Exception:
        pass
    if vmem_cap >= 96 * 1024 * 1024:     # v5e / v6e: 128 MiB VMEM
        return 2048, 96 * 1024 * 1024
    return 1024, 48 * 1024 * 1024        # v7x: 64 MiB per TensorCore


# ---------------------------------------------------------------------------
# Pass 1: fused RMSNorm * gamma (once per token, outside the matmul hot loop)
# ---------------------------------------------------------------------------
def _rmsnorm_kernel(x_ref, g_ref, o_ref):
    # x_ref: (tm, H)   g_ref: (1, H)   o_ref: (tm, H)
    x = x_ref[...].astype(jnp.float32)
    var = jnp.mean(x * x, axis=-1, keepdims=True)
    # Match PyTorch DeepseekV2RMSNorm: downcast to model dtype, THEN * gamma.
    xn = (x * jax.lax.rsqrt(var + RMS_EPS)).astype(o_ref.dtype)
    o_ref[...] = xn * g_ref[...]


def _rmsnorm(x2d, gamma, out_dtype, tm):
    T_pad, H = x2d.shape
    return pl.pallas_call(
        _rmsnorm_kernel,
        out_shape=jax.ShapeDtypeStruct((T_pad, H), out_dtype),
        grid=(T_pad // tm,),
        in_specs=[
            pl.BlockSpec((tm, H), lambda i: (i, 0)),
            pl.BlockSpec((1, H), lambda i: (0, 0)),
        ],
        out_specs=pl.BlockSpec((tm, H), lambda i: (i, 0)),
        compiler_params=pltpu.CompilerParams(
            dimension_semantics=("parallel",),
        ),
    )(x2d, gamma.reshape(1, H).astype(out_dtype))


# ---------------------------------------------------------------------------
# Pass 2: logits matmul against the native-layout [V, H] lm_head weight
# ---------------------------------------------------------------------------
def _logits_kernel(x_ref, w_ref, o_ref):
    # x_ref: (tm, H) pre-normalized activations (model dtype)
    # w_ref: (tn, H) lm_head weight tile, native [V, H] layout
    # o_ref: (tm, tn)
    # Contract on H (x @ W^T) directly on the MXU; no weight transpose in HBM
    # or in-kernel.  Accumulate in f32.
    o_ref[...] = jax.lax.dot_general(
        x_ref[...], w_ref[...],
        dimension_numbers=(((1,), (1,)), ((), ())),
        preferred_element_type=jnp.float32,
    ).astype(o_ref.dtype)


def lm_head_forward(hidden_states, norm_weight, lm_head_weight,
                    *, tm=256, tn=None, vmem_limit_bytes=None):
    """hidden_states: [B, S, H], norm_weight: [H], lm_head_weight: [V, H]."""
    B, S, H = hidden_states.shape
    V, Hw = lm_head_weight.shape
    assert Hw == H
    T = B * S

    if tn is None or vmem_limit_bytes is None:
        d_tn, d_vmem = _default_tiling()
        tn = d_tn if tn is None else tn
        vmem_limit_bytes = d_vmem if vmem_limit_bytes is None else vmem_limit_bytes

    # Token tile: multiple of 16 (bf16 packs 2 rows per sublane).
    tm = max(16, (min(tm, _round_up(T, 16)) // 16) * 16)
    T_pad = _round_up(T, tm)

    # Vocab tile: pick tn from divisors of the 128-aligned vocab so the huge
    # weight never needs re-padding (a per-call HBM copy of ~1 GB otherwise).
    V_pad = _round_up(V, 128)
    tn = max(128, (min(tn, V_pad) // 128) * 128)
    while V_pad % tn != 0:
        tn -= 128

    x2d = hidden_states.reshape(T, H)
    if T_pad != T:
        x2d = jnp.pad(x2d, ((0, T_pad - T), (0, 0)))   # zero rows -> zero logits

    w = lm_head_weight                                  # keep native [V, H] layout
    if V_pad != V:
        # TODO(synk): pad the vocab once at checkpoint-load time, not per call.
        w = jnp.pad(w, ((0, V_pad - V), (0, 0)))

    # Pass 1: normalize + gamma once, in the matmul (model) dtype.
    xn = _rmsnorm(x2d, norm_weight, w.dtype, tm)

    # Pass 2: vocab outer / tokens inner -> each weight tile is DMA'd from HBM
    # exactly once; the small activation tile is the re-streamed operand.
    grid = (V_pad // tn, T_pad // tm)

    w_map = lambda j, i: (j, 0)
    decode_shaped = T_pad <= tm                         # single token tile
    if decode_shaped:
        # Decode is a back-to-back weight-DMA stream; a 3rd buffer hides DMA
        # issue latency between steps.
        try:
            w_spec = pl.BlockSpec((tn, H), w_map, pipeline_mode=pl.Buffered(3))
        except TypeError:                               # BlockSpec w/o pipeline_mode
            w_spec = pl.BlockSpec((tn, H), w_map)
    else:
        w_spec = pl.BlockSpec((tn, H), w_map)

    out = pl.pallas_call(
        _logits_kernel,
        out_shape=jax.ShapeDtypeStruct((T_pad, V_pad), hidden_states.dtype),
        grid_spec=pltpu.PrefetchScalarGridSpec(
            num_scalar_prefetch=0,
            grid=grid,
            in_specs=[
                pl.BlockSpec((tm, H), lambda j, i: (i, 0)),   # activations
                w_spec,                                       # lm_head weight [V, H]
            ],
            out_specs=pl.BlockSpec((tm, tn), lambda j, i: (i, j)),
        ),
        compiler_params=pltpu.CompilerParams(
            # Vocab-outer stays the leading parallel axis so v7x megacore
            # shards the weight stream across both TensorCores.
            dimension_semantics=("parallel", "parallel"),
            vmem_limit_bytes=vmem_limit_bytes,
        ),
    )(xn, w)

    if T_pad != T or V_pad != V:
        # TODO(synk): for prefill-sized calls prefer returning padded logits
        # and masking downstream; this slice copies the logits once in HBM.
        out = out[:T, :V]
    return out.reshape(B, S, V)


def _reference(hidden_states, norm_weight, lm_head_weight):
    x = hidden_states.astype(jnp.float32)
    var = jnp.mean(x * x, axis=-1, keepdims=True)
    xn = (x * jax.lax.rsqrt(var + RMS_EPS)).astype(hidden_states.dtype) * norm_weight
    logits = jax.lax.dot_general(
        xn.astype(lm_head_weight.dtype), lm_head_weight,
        dimension_numbers=(((xn.ndim - 1,), (1,)), ((), ())),
        preferred_element_type=jnp.float32,
    )
    return logits.astype(hidden_states.dtype)


if __name__ == "__main__":
    # Small, DeepSeek-V2-shaped synthetic config (bf16 model dtype).
    B, S, H, V = 2, 8, 256, 512
    key = jax.random.PRNGKey(0)
    k1, k2, k3 = jax.random.split(key, 3)

    dtype = jnp.bfloat16
    hidden_states = jax.random.normal(k1, (B, S, H), dtype=jnp.float32).astype(dtype)
    norm_weight = (1.0 + 0.01 * jax.random.normal(k2, (H,), dtype=jnp.float32)).astype(dtype)
    lm_head_weight = (0.02 * jax.random.normal(k3, (V, H), dtype=jnp.float32)).astype(dtype)

    logits = lm_head_forward(hidden_states, norm_weight, lm_head_weight)
    logits = jax.block_until_ready(logits)

    ref = _reference(hidden_states, norm_weight, lm_head_weight)
    assert logits.shape == (B, S, V)
    assert jnp.allclose(logits.astype(jnp.float32), ref.astype(jnp.float32),
                        atol=2e-2, rtol=2e-2)

    print("KERNEL_OK")
</pallas_src>

<mosaic_0001>
module attributes {stable_mosaic.version = 11 : i64} {
  func.func @_rmsnorm_kernel(%arg0: i32, %arg1: memref<16x256xbf16, #tpu.memory_space<vmem>>, %arg2: memref<1x256xbf16, #tpu.memory_space<vmem>>, %arg3: memref<16x256xbf16, #tpu.memory_space<vmem>>) attributes {dimension_semantics = [#tpu.dimension_semantics<parallel>], iteration_bounds = array<i64: 1>, scalar_prefetch = 0 : i64, scratch_operands = 0 : i64, tpu.core_type = #tpu.core_type<tc>, window_params = [{transform_indices = @transform_0, window_bounds = array<i64: 16, 256>}, {pipeline_mode = #tpu.pipeline_mode<synchronous>, transform_indices = @transform_1, window_bounds = array<i64: 1, 256>}, {transform_indices = @transform_2, window_bounds = array<i64: 16, 256>}]} {
    %c0 = arith.constant 0 : index
    %c0_0 = arith.constant 0 : index
    %0 = vector.load %arg1[%c0, %c0_0] : memref<16x256xbf16, #tpu.memory_space<vmem>>, vector<16x256xbf16>
    %1 = arith.extf %0 : vector<16x256xbf16> to vector<16x256xf32>
    %2 = arith.mulf %1, %1 : vector<16x256xf32>
    %cst = arith.constant dense<0.000000e+00> : vector<16xf32>
    %3 = vector.multi_reduction <add>, %2, %cst [1] : vector<16x256xf32> to vector<16xf32>
    %4 = vector.shape_cast %3 : vector<16xf32> to vector<16x1xf32>
    %cst_1 = arith.constant 2.560000e+02 : f32
    %5 = vector.broadcast %cst_1 : f32 to vector<16x1xf32>
    %6 = arith.divf %4, %5 : vector<16x1xf32>
    %cst_2 = arith.constant 9.99999997E-7 : f32
    %7 = vector.broadcast %cst_2 : f32 to vector<16x1xf32>
    %8 = arith.addf %6, %7 : vector<16x1xf32>
    %9 = math.rsqrt %8 : vector<16x1xf32>
    %10 = vector.broadcast %9 : vector<16x1xf32> to vector<16x256xf32>
    %11 = arith.mulf %1, %10 : vector<16x256xf32>
    %12 = arith.truncf %11 : vector<16x256xf32> to vector<16x256xbf16>
    %c0_3 = arith.constant 0 : index
    %c0_4 = arith.constant 0 : index
    %13 = vector.load %arg2[%c0_3, %c0_4] : memref<1x256xbf16, #tpu.memory_space<vmem>>, vector<1x256xbf16>
    %14 = vector.broadcast %13 : vector<1x256xbf16> to vector<16x256xbf16>
    %15 = arith.mulf %12, %14 : vector<16x256xbf16>
    %c0_5 = arith.constant 0 : index
    %c0_6 = arith.constant 0 : index
    %16 = vector.load %arg3[%c0_5, %c0_6] : memref<16x256xbf16, #tpu.memory_space<vmem>>, vector<16x256xbf16>
    tpu.vector_store %arg3[%c0_5, %c0_6], %15 {strides = array<i32>} : memref<16x256xbf16, #tpu.memory_space<vmem>>, vector<16x256xbf16>,
    return
  }
  func.func @transform_0(%arg0: i32) -> (i32, i32) {
    %c0_i32 = arith.constant 0 : i32
    %c0_i32_0 = arith.constant 0 : i32
    return %arg0, %c0_i32 : i32, i32
  }
  func.func @transform_1(%arg0: i32) -> (i32, i32) {
    %c0_i32 = arith.constant 0 : i32
    %c0_i32_0 = arith.constant 0 : i32
    %c0_i32_1 = arith.constant 0 : i32
    return %c0_i32, %c0_i32_0 : i32, i32
  }
  func.func @transform_2(%arg0: i32) -> (i32, i32) {
    %c0_i32 = arith.constant 0 : i32
    %c0_i32_0 = arith.constant 0 : i32
    return %arg0, %c0_i32 : i32, i32
  }
}

</mosaic_0001>

<llo_original>
// kernel: tpu_custom_call.1
$region0: #{tpu_custom_call.1}
  #allocation0 [shape = 'u32[]', space=smem, size = 0x4, offset = 0x4, fixed_abs, tag = 'smem constant byte address 0x4 - core index']
  #allocation1 [shape = 'u32[144,128]{1,0:T(1,128)}', space=vmem, size = 0x12000, scoped, tag = 'internal scratch']
  %s0 = inlined_call_operand.hbm [shape: bf16[16,256], index: 0, kind: input, shape index: {}]
  %s1 = inlined_call_operand.hbm [shape: bf16[1,256], index: 1, kind: input, shape index: {}]
  %s2 = inlined_call_operand.hbm [shape: bf16[16,256], index: 2, kind: output, shape index: {}]
  %s3 = sld [smem:[#allocation0]]
  $region26: #{tpu_custom_call.1} parent=0
    _
  %s5 = ssub.s32 1, %s3
  %s6 = scalar_select 0, %s5, %s3
  $region1: #{tpu_custom_call.1} parent=0
    #allocation2 [shape = 'u8[8192]{0}', space=vmem, size = 0x2000, scoped, tag = 'input window, operand 0, single buffered']
    #allocation3 [shape = 's32[1]{0}', space=sflag, size = 0x4, scoped, tag = 'scoped memory for tpu_custom_call.1']
    #allocation4 [shape = 's32[1]{0}', space=sflag, size = 0x4, scoped, tag = 'scoped memory for tpu_custom_call.1']
    #allocation5 [shape = 'u8[1024]{0}', space=vmem, size = 0x400, scoped, tag = 'input window, operand 1, single buffered']
    #allocation6 [shape = 's32[1]{0}', space=sflag, size = 0x4, scoped, tag = 'scoped memory for tpu_custom_call.1']
    #allocation7 [shape = 'u8[8192]{0}', space=vmem, size = 0x2000, scoped, tag = 'output window, operand 0, single buffered']
    %7 = vsyncpa [#allocation3], 0
    %8 = vsyncpa [#allocation6], 0
    %9 = vsyncpa [#allocation4], 0
    // Predicated region
    $region2: #{tpu_custom_call.1} parent=1 // pred_check
      _
    $region3: #{tpu_custom_call.1} parent=1 // pred_check_branch
      %11 = sbr.rel (0) target = $region5
    $region4: #{tpu_custom_call.1} parent=1 // pred_region
      %s13 = ssub.s32 256, 256
      %14 = vsyncadd [#allocation3], %s13
      %s15 = sshll.u32 [#allocation2], 4
      %s16 = int_to_ptr.vmem [resolvable:$true] %s15
      %21 = dma.hbm_to_vmem [thread:$0]  %s0, 256, %s16, [#allocation3], 128, 128, 8
    $region5: #{tpu_custom_call.1} parent=1 // pred_fallthru
      _
    // Predicated region
    $region6: #{tpu_custom_call.1} parent=1 // pred_check
      _
    $region7: #{tpu_custom_call.1} parent=1 // pred_check_branch
      %23 = sbr.rel (0) target = $region9
    $region8: #{tpu_custom_call.1} parent=1 // pred_region
      %s25 = ssub.s32 32, 32
      %26 = vsyncadd [#allocation6], %s25
      %s28 = sshll.u32 [#allocation5], 4
      %s29 = int_to_ptr.vmem [resolvable:$true] %s28
      %31 = dma.hbm_to_vmem [thread:$0]  %s1, 32, %s29, [#allocation6]
    $region9: #{tpu_custom_call.1} parent=1 // pred_fallthru
      _
    // Predicated region
    $region10: #{tpu_custom_call.1} parent=1 // pred_check
      _
    $region11: #{tpu_custom_call.1} parent=1 // pred_check_branch
      %33 = sbr.rel (0) target = $region13
    $region12: #{tpu_custom_call.1} parent=1 // pred_region
      %34 = dma.done [#allocation3], 256
    $region13: #{tpu_custom_call.1} parent=1 // pred_fallthru
      _
    // Predicated region
    $region14: #{tpu_custom_call.1} parent=1 // pred_check
      _
    $region15: #{tpu_custom_call.1} parent=1 // pred_check_branch
      %36 = sbr.rel (0) target = $region17
    $region16: #{tpu_custom_call.1} parent=1 // pred_region
      %37 = dma.done [#allocation6], 32
    $region17: #{tpu_custom_call.1} parent=1 // pred_fallthru
      _
    %v38 = vld [vmem:[#allocation2] sm:$0xff]
    %v39 = vld [vmem:[#allocation2 + $0x8] sm:$0xff]
    %v40 = vunpack.c.l.bf16 %v38
    %v41 = vunpack.c.h.bf16 %v38
    %v42 = vunpack.c.l.bf16 %v39
    %v43 = vunpack.c.h.bf16 %v39
    %v44 = vmul.f32 %v40, %v40
    %v45 = vmul.f32 %v41, %v41
    %v46 = vmul.f32 %v42, %v42
    %v47 = vmul.f32 %v43, %v43
    %v48 = vadd.f32 %v44, %v45
    %49 = vadd.xlane.f32.xlu0 %v48
    %v50 = vpop.xlane.xlu0 %49
    %v51 = vadd.f32 %v46, %v47
    %52 = vadd.xlane.f32.xlu0 %v51
    %v53 = vpop.xlane.xlu0 %52
    %v54 = vrcp.pop 256.0
    %v55 = vmul.f32 %v50, %v54
    %v56 = vmul.f32 %v53, %v54
    %v57 = vadd.f32 %v55, 1e-06
    %v58 = vadd.f32 %v56, 1e-06
    %v59 = vrsqrt.pop %v57
    %v60 = vrsqrt.pop %v58
    %v61 = vmul.f32 %v40, %v59
    %v62 = vmul.f32 %v41, %v59
    %v63 = vmul.f32 %v42, %v60
    %v64 = vmul.f32 %v43, %v60
    %v65 = vpack.c.bf16 %v63, %v61
    %v66 = vpack.c.bf16 %v64, %v62
    %v67 = vld [vmem:[#allocation5] sm:$0x3]
    %v70 = vunpack.c.l.s4 1966171168
    %v71 = vunpack.c.0.s8 %v70
    %v72 = vlaneseq
    %v73 = vshrl.u32 %v72, 7
    %v74 = vsub.s32 %v71, %v73
    %v75 = vrot.slane %v67, %v74
    %v76 = vcombine.high %v75, %v75
    %v78 = vunpack.c.l.s4 1966171168
    %v79 = vunpack.c.0.s8 %v78
    %v80 = vlaneseq
    %v81 = vshrl.u32 %v80, 7
    %v82 = vsub.s32 %v79, %v81
    %v83 = vrot.slane %v75, %v82
    %v85 = vunpack.c.l.s4 1966171168
    %v86 = vunpack.c.0.s8 %v85
    %v87 = vlaneseq
    %v88 = vshrl.u32 %v87, 7
    %v89 = vsub.s32 %v86, %v88
    %v90 = vrot.slane %v76, %v89
    %v92 = vpack.i.b16 %v83, %v83
    %v94 = vlaneseq
    %v95 = vshrl.u32 %v94, 7
    %v96 = vsub.s32 0, %v95
    %v97 = vrot.slane %v92, %v96
    %v99 = vpack.i.b16 %v90, %v90
    %v101 = vlaneseq
    %v102 = vshrl.u32 %v101, 7
    %v103 = vsub.s32 0, %v102
    %v104 = vrot.slane %v99, %v103
    %v105 = vmul.bf16 %v65, %v97
    %v106 = vmul.bf16 %v66, %v104
    %v109 = vunpack.c.l.b16 %v105
    %v110 = vunpack.c.l.b16 %v106
    %v111 = vunpack.c.h.b16 %v105
    %v112 = vunpack.c.h.b16 %v106
    %v113 = vpack.c.b16 %v110, %v109
    %v114 = vpack.c.b16 %v112, %v111
    %117 = vst [vmem:[#allocation7] sm:$0xff] %v113
    %118 = vst [vmem:[#allocation7 + $0x8] sm:$0xff] %v114
    // Predicated region
    $region18: #{tpu_custom_call.1} parent=1 // pred_check
      _
    $region19: #{tpu_custom_call.1} parent=1 // pred_check_branch
      %120 = sbr.rel (0) target = $region21
    $region20: #{tpu_custom_call.1} parent=1 // pred_region
      %s122 = ssub.s32 256, 256
      %123 = vsyncadd [#allocation4], %s122
      %s124 = sshll.u32 [#allocation7], 4
      %s125 = int_to_ptr.vmem [resolvable:$true] %s124
      %130 = dma.vmem_to_hbm [thread:$0]  %s125, 256, %s2, [#allocation4], 128, 128, 8
    $region21: #{tpu_custom_call.1} parent=1 // pred_fallthru
      _
    // Predicated region
    $region22: #{tpu_custom_call.1} parent=1 // pred_check
      _
    $region23: #{tpu_custom_call.1} parent=1 // pred_check_branch
      %132 = sbr.rel (0) target = $region25
    $region24: #{tpu_custom_call.1} parent=1 // pred_region
      %133 = dma.done [#allocation4], 256
    $region25: #{tpu_custom_call.1} parent=1 // pred_fallthru
      _
    %134 = vsyncpa [#allocation3], 1
    %135 = vsyncpa [#allocation6], 1
    %136 = vsyncpa [#allocation4], 1

</llo_original>
